<compile_context>
chip_gen: v6e
topology: v6e:2x2x1
jax: 0.10.0
libtpu: 0.0.40
codegen_flags: <defaults>
</compile_context>

<pallas_src>
import functools

import jax
import jax.numpy as jnp
from jax import lax
from jax.experimental import pallas as pl
from jax.experimental.pallas import tpu as pltpu

_LANES = 128


def _default_budget():
    """Returns (target x-block bytes, vmem_limit_bytes) tuned per TPU gen."""
    try:
        vmem_cap = int(pltpu.get_tpu_info().vmem_capacity_bytes)
    except Exception:
        vmem_cap = 0
    if vmem_cap >= (96 << 20):
        # v5e / v6e: 128 MiB physical VMEM -> big streaming tiles amortize the
        # ~0.35 us per-grid-step overhead and lengthen each DMA run.
        return 8 << 20, 80 << 20
    # v7x (64 MiB VMEM) or unknown chip: keep 2 pipeline buffers + scratch
    # comfortably inside the budget.
    return 4 << 20, 40 << 20


def channel_gate_kernel(x_ref, w1_ref, b1_ref, w2_ref, b2_ref, o_ref, acc_ref,
                        *, hw_valid, thw, c_sub):
    """Grid = (batch_tiles, hw_tiles).  acc_ref: (nt, C, 128) f32 lane partials."""
    k = pl.program_id(1)
    nt, c, _ = acc_ref.shape
    n_chunks = thw // _LANES
    unroll = min(8, n_chunks)
    needs_mask = (hw_valid % thw) != 0  # static: only emit mask code if needed

    @pl.when(k == 0)
    def _init():
        acc_ref[...] = jnp.zeros_like(acc_ref)

    if needs_mask:
        # Lanes at global position >= hw_valid are padding / stale DMA data.
        valid = hw_valid - k * thw
        # Hoisted out of the loops (JAX does not CSE broadcast_in_dim).
        lane = jax.lax.broadcasted_iota(jnp.int32, (nt, c_sub, _LANES), 2)

    # Sub-block over C so the live accumulator stays small (~nt*c_sub/8 vregs);
    # the 128-lane chunk loop is a modestly unrolled fori_loop (no register
    # blow-up, LLO keeps scheduling visibility).
    for cs in range(c // c_sub):
        c0 = cs * c_sub

        def body(j, acc, c0=c0):
            start = pl.multiple_of(j * _LANES, _LANES)
            chunk = x_ref[:, c0:c0 + c_sub, pl.ds(start, _LANES)]
            chunk = chunk.astype(jnp.float32)
            if needs_mask:
                chunk = jnp.where(start + lane < valid, chunk, 0.0)
            return acc + chunk

        acc = lax.fori_loop(0, n_chunks, body,
                            acc_ref[:, c0:c0 + c_sub, :], unroll=unroll)
        acc_ref[:, c0:c0 + c_sub, :] = acc

    @pl.when(k == pl.num_programs(1) - 1)
    def _epilogue():
        # One cross-lane reduce + 1/HW scale (masked / clamped tail lanes
        # contribute zero, and we divide by the true HW, so the mean is exact).
        pooled = jnp.sum(acc_ref[...], axis=-1) * (1.0 / hw_valid)  # (nt, C)

        # conv1 (1x1) == matmul, then ReLU
        h = jnp.dot(pooled, w1_ref[...], preferred_element_type=jnp.float32)
        h = jnp.maximum(h + b1_ref[...], 0.0)

        # conv2 (1x1) == matmul, then sigmoid
        y = jnp.dot(h, w2_ref[...], preferred_element_type=jnp.float32)
        y = jax.nn.sigmoid(y + b2_ref[...])

        o_ref[...] = y.astype(o_ref.dtype)


def channel_gate(x_nchw, w1, b1, w2, b2, *, target_block_bytes=None,
                 vmem_limit_bytes=None):
    """x_nchw: (N, C, H, W); returns (N, C, 1, 1) like the PyTorch module.

    w1: (C, C//16), b1: (C//16,), w2: (C//16, C), b2: (C,)
    (1x1 conv weights expressed as (in, out) matmul weights).
    """
    n, c, h, w = x_nchw.shape
    hid = w1.shape[1]
    hw = h * w
    dtype = x_nchw.dtype
    bytes_per = jnp.dtype(dtype).itemsize

    default_blk, default_vmem = _default_budget()
    if target_block_bytes is None:
        target_block_bytes = default_blk
    if vmem_limit_bytes is None:
        vmem_limit_bytes = default_vmem

    # Batch tile (sublane-friendly).  Partial last batch block is handled by
    # Pallas (clamped DMA): stale rows produce garbage that is never written
    # back (output writes past N are dropped) and never read by valid rows.
    nt = min(n, 8)

    x3 = x_nchw.reshape(n, c, hw)
    hw_arr = hw
    if hw_arr < _LANES:
        # Degenerate tiny-spatial case only: pad the lane dim to one vreg row.
        x3 = jnp.pad(x3, ((0, 0), (0, 0), (0, _LANES - hw_arr)))
        hw_arr = _LANES

    # HW tile: multiple of 128 lanes, sized near target_block_bytes, and never
    # larger than the 128-aligned floor of HW so every block starts inside the
    # array (standard partial-last-block handling; tail lanes masked in-kernel).
    thw = max(_LANES,
              (target_block_bytes // max(1, nt * c * bytes_per)) // _LANES * _LANES)
    thw = min(thw, (hw_arr // _LANES) * _LANES)

    c_sub = 8 if c % 8 == 0 else 1

    grid = (pl.cdiv(n, nt), pl.cdiv(hw_arr, thw))

    b1r = b1.reshape(1, hid)
    b2r = b2.reshape(1, c)

    wbytes = jnp.dtype(w1.dtype).itemsize
    cost = pl.CostEstimate(
        flops=n * c * hw + 4 * n * c * hid,            # pooling adds + two matmuls
        transcendentals=n * c,                          # sigmoid
        bytes_accessed=(n * c * hw * bytes_per          # streamed input (no pad copy)
                        + 2 * c * hid * wbytes          # weights
                        + (c + hid) * wbytes            # biases
                        + n * c * bytes_per),           # gate output
    )

    out = pl.pallas_call(
        functools.partial(channel_gate_kernel, hw_valid=hw, thw=thw, c_sub=c_sub),
        out_shape=jax.ShapeDtypeStruct((n, c), dtype),
        grid_spec=pltpu.PrefetchScalarGridSpec(
            num_scalar_prefetch=0,
            grid=grid,
            in_specs=[
                pl.BlockSpec((nt, c, thw), lambda b, k: (b, 0, k)),   # x tiles
                pl.BlockSpec((c, hid), lambda b, k: (0, 0)),          # w1 (resident)
                pl.BlockSpec((1, hid), lambda b, k: (0, 0)),          # b1
                pl.BlockSpec((hid, c), lambda b, k: (0, 0)),          # w2
                pl.BlockSpec((1, c), lambda b, k: (0, 0)),            # b2
            ],
            # Same block index across the HW axis -> resident output, written
            # back once per batch tile.
            out_specs=pl.BlockSpec((nt, c), lambda b, k: (b, 0)),
            scratch_shapes=[pltpu.VMEM((nt, c, _LANES), jnp.float32)],
        ),
        compiler_params=pltpu.CompilerParams(
            dimension_semantics=("parallel", "arbitrary"),
            vmem_limit_bytes=vmem_limit_bytes,
        ),
        cost_estimate=cost,
    )(x3, w1, b1r, w2, b2r)

    # TODO(synk): the typical CBAM-style caller immediately computes x * gate;
    # fusing that multiply into a second streamed pass would save a full HBM
    # round-trip, but the reference module returns only the gate.
    return out.reshape(n, c, 1, 1)


def channel_gate_ref(x_nchw, w1, b1, w2, b2):
    pooled = jnp.mean(x_nchw.astype(jnp.float32), axis=(2, 3))   # (N, C)
    h = jnp.maximum(pooled @ w1 + b1, 0.0)                       # (N, C//16)
    y = jax.nn.sigmoid(h @ w2 + b2)                              # (N, C)
    return y.reshape(*y.shape, 1, 1).astype(x_nchw.dtype)


if __name__ == "__main__":
    # Small shapes consistent with the module; C must be divisible by 16.
    N, C, H, W = 2, 64, 16, 16
    HID = C // 16

    key = jax.random.PRNGKey(0)
    kx, kw1, kb1, kw2, kb2, kx2 = jax.random.split(key, 6)

    x = jax.random.normal(kx, (N, C, H, W), dtype=jnp.float32)
    w1 = jax.random.normal(kw1, (C, HID), dtype=jnp.float32) * 0.1
    b1 = jax.random.normal(kb1, (HID,), dtype=jnp.float32) * 0.1
    w2 = jax.random.normal(kw2, (HID, C), dtype=jnp.float32) * 0.1
    b2 = jax.random.normal(kb2, (C,), dtype=jnp.float32) * 0.1

    out = channel_gate(x, w1, b1, w2, b2)
    out = jax.block_until_ready(out)
    ref = channel_gate_ref(x, w1, b1, w2, b2)
    assert out.shape == (N, C, 1, 1)
    assert jnp.allclose(out, ref, atol=1e-5, rtol=1e-5)

    # Non-128-aligned spatial size to exercise the in-kernel tail-mask path
    # (no jnp.pad of the big tensor anymore).
    x2 = jax.random.normal(kx2, (3, C, 13, 11), dtype=jnp.float32)
    out2 = jax.block_until_ready(channel_gate(x2, w1, b1, w2, b2))
    ref2 = channel_gate_ref(x2, w1, b1, w2, b2)
    assert out2.shape == (3, C, 1, 1)
    assert jnp.allclose(out2, ref2, atol=1e-5, rtol=1e-5)

    print("KERNEL_OK")
</pallas_src>

<mosaic_0001>
module attributes {stable_mosaic.version = 11 : i64} {
  func.func @channel_gate_kernel(%arg0: i32, %arg1: i32, %arg2: memref<2x64x256xf32, #tpu.memory_space<vmem>>, %arg3: memref<64x4xf32, #tpu.memory_space<vmem>>, %arg4: memref<1x4xf32, #tpu.memory_space<vmem>>, %arg5: memref<4x64xf32, #tpu.memory_space<vmem>>, %arg6: memref<1x64xf32, #tpu.memory_space<vmem>>, %arg7: memref<2x64xf32, #tpu.memory_space<vmem>>, %arg8: memref<2x64x128xf32, #tpu.memory_space<vmem>>) attributes {dimension_semantics = [#tpu.dimension_semantics<parallel>, #tpu.dimension_semantics<arbitrary>], iteration_bounds = array<i64: 1, 1>, scalar_prefetch = 0 : i64, scratch_operands = 1 : i64, tpu.core_type = #tpu.core_type<tc>, window_params = [{transform_indices = @transform_0, window_bounds = array<i64: 2, 64, 256>}, {pipeline_mode = #tpu.pipeline_mode<synchronous>, transform_indices = @transform_1, window_bounds = array<i64: 64, 4>}, {pipeline_mode = #tpu.pipeline_mode<synchronous>, transform_indices = @transform_2, window_bounds = array<i64: 1, 4>}, {pipeline_mode = #tpu.pipeline_mode<synchronous>, transform_indices = @transform_3, window_bounds = array<i64: 4, 64>}, {pipeline_mode = #tpu.pipeline_mode<synchronous>, transform_indices = @transform_4, window_bounds = array<i64: 1, 64>}, {transform_indices = @transform_5, window_bounds = array<i64: 2, 64>}]} {
    %c0_i32 = arith.constant 0 : i32
    %0 = arith.cmpi eq, %arg1, %c0_i32 : i32
    %1 = arith.extui %0 : i1 to i32
    %c0_i32_0 = arith.constant 0 : i32
    %2 = arith.cmpi ne, %1, %c0_i32_0 : i32
    scf.if %2 {
      %cst = arith.constant 0.000000e+00 : f32
      %102 = vector.broadcast %cst : f32 to vector<2x64x128xf32>
      %c0_112 = arith.constant 0 : index
      %c0_113 = arith.constant 0 : index
      %c0_114 = arith.constant 0 : index
      %103 = vector.load %arg8[%c0_112, %c0_113, %c0_114] : memref<2x64x128xf32, #tpu.memory_space<vmem>>, vector<2x64x128xf32>
      tpu.vector_store %arg8[%c0_112, %c0_113, %c0_114], %102 {strides = array<i32>} : memref<2x64x128xf32, #tpu.memory_space<vmem>>, vector<2x64x128xf32>,
    } else {
    }
    %c0 = arith.constant 0 : index
    %c0_1 = arith.constant 0 : index
    %c0_2 = arith.constant 0 : index
    %3 = vector.load %arg8[%c0, %c0_1, %c0_2] : memref<2x64x128xf32, #tpu.memory_space<vmem>>, vector<2x8x128xf32>
    %c0_i32_3 = arith.constant 0 : i32
    %c128_i32 = arith.constant 128 : i32
    %4 = arith.muli %c0_i32_3, %c128_i32 : i32
    %5 = tpu.assume_multiple %4, 128 : i32
    %c0_4 = arith.constant 0 : index
    %c0_5 = arith.constant 0 : index
    %6 = arith.index_cast %5 : i32 to index
    %7 = vector.load %arg2[%c0_4, %c0_5, %6] : memref<2x64x256xf32, #tpu.memory_space<vmem>>, vector<2x8x128xf32>
    %8 = arith.addf %3, %7 : vector<2x8x128xf32>
    %c1_i32 = arith.constant 1 : i32
    %c128_i32_6 = arith.constant 128 : i32
    %9 = arith.muli %c1_i32, %c128_i32_6 : i32
    %10 = tpu.assume_multiple %9, 128 : i32
    %c0_7 = arith.constant 0 : index
    %c0_8 = arith.constant 0 : index
    %11 = arith.index_cast %10 : i32 to index
    %12 = vector.load %arg2[%c0_7, %c0_8, %11] : memref<2x64x256xf32, #tpu.memory_space<vmem>>, vector<2x8x128xf32>
    %13 = arith.addf %8, %12 : vector<2x8x128xf32>
    %c2_i32 = arith.constant 2 : i32
    %c0_9 = arith.constant 0 : index
    %c0_10 = arith.constant 0 : index
    %c0_11 = arith.constant 0 : index
    %14 = vector.load %arg8[%c0_9, %c0_10, %c0_11] : memref<2x64x128xf32, #tpu.memory_space<vmem>>, vector<2x8x128xf32>
    tpu.vector_store %arg8[%c0_9, %c0_10, %c0_11], %13 {strides = array<i32>} : memref<2x64x128xf32, #tpu.memory_space<vmem>>, vector<2x8x128xf32>,
    %c0_12 = arith.constant 0 : index
    %c8 = arith.constant 8 : index
    %c0_13 = arith.constant 0 : index
    %15 = vector.load %arg8[%c0_12, %c8, %c0_13] : memref<2x64x128xf32, #tpu.memory_space<vmem>>, vector<2x8x128xf32>
    %c0_i32_14 = arith.constant 0 : i32
    %c128_i32_15 = arith.constant 128 : i32
    %16 = arith.muli %c0_i32_14, %c128_i32_15 : i32
    %17 = tpu.assume_multiple %16, 128 : i32
    %c0_16 = arith.constant 0 : index
    %c8_17 = arith.constant 8 : index
    %18 = arith.index_cast %17 : i32 to index
    %19 = vector.load %arg2[%c0_16, %c8_17, %18] : memref<2x64x256xf32, #tpu.memory_space<vmem>>, vector<2x8x128xf32>
    %20 = arith.addf %15, %19 : vector<2x8x128xf32>
    %c1_i32_18 = arith.constant 1 : i32
    %c128_i32_19 = arith.constant 128 : i32
    %21 = arith.muli %c1_i32_18, %c128_i32_19 : i32
    %22 = tpu.assume_multiple %21, 128 : i32
    %c0_20 = arith.constant 0 : index
    %c8_21 = arith.constant 8 : index
    %23 = arith.index_cast %22 : i32 to index
    %24 = vector.load %arg2[%c0_20, %c8_21, %23] : memref<2x64x256xf32, #tpu.memory_space<vmem>>, vector<2x8x128xf32>
    %25 = arith.addf %20, %24 : vector<2x8x128xf32>
    %c2_i32_22 = arith.constant 2 : i32
    %c0_23 = arith.constant 0 : index
    %c8_24 = arith.constant 8 : index
    %c0_25 = arith.constant 0 : index
    %26 = vector.load %arg8[%c0_23, %c8_24, %c0_25] : memref<2x64x128xf32, #tpu.memory_space<vmem>>, vector<2x8x128xf32>
    tpu.vector_store %arg8[%c0_23, %c8_24, %c0_25], %25 {strides = array<i32>} : memref<2x64x128xf32, #tpu.memory_space<vmem>>, vector<2x8x128xf32>,
    %c0_26 = arith.constant 0 : index
    %c16 = arith.constant 16 : index
    %c0_27 = arith.constant 0 : index
    %27 = vector.load %arg8[%c0_26, %c16, %c0_27] : memref<2x64x128xf32, #tpu.memory_space<vmem>>, vector<2x8x128xf32>
    %c0_i32_28 = arith.constant 0 : i32
    %c128_i32_29 = arith.constant 128 : i32
    %28 = arith.muli %c0_i32_28, %c128_i32_29 : i32
    %29 = tpu.assume_multiple %28, 128 : i32
    %c0_30 = arith.constant 0 : index
    %c16_31 = arith.constant 16 : index
    %30 = arith.index_cast %29 : i32 to index
    %31 = vector.load %arg2[%c0_30, %c16_31, %30] : memref<2x64x256xf32, #tpu.memory_space<vmem>>, vector<2x8x128xf32>
    %32 = arith.addf %27, %31 : vector<2x8x128xf32>
    %c1_i32_32 = arith.constant 1 : i32
    %c128_i32_33 = arith.constant 128 : i32
    %33 = arith.muli %c1_i32_32, %c128_i32_33 : i32
    %34 = tpu.assume_multiple %33, 128 : i32
    %c0_34 = arith.constant 0 : index
    %c16_35 = arith.constant 16 : index
    %35 = arith.index_cast %34 : i32 to index
    %36 = vector.load %arg2[%c0_34, %c16_35, %35] : memref<2x64x256xf32, #tpu.memory_space<vmem>>, vector<2x8x128xf32>
    %37 = arith.addf %32, %36 : vector<2x8x128xf32>
    %c2_i32_36 = arith.constant 2 : i32
    %c0_37 = arith.constant 0 : index
    %c16_38 = arith.constant 16 : index
    %c0_39 = arith.constant 0 : index
    %38 = vector.load %arg8[%c0_37, %c16_38, %c0_39] : memref<2x64x128xf32, #tpu.memory_space<vmem>>, vector<2x8x128xf32>
    tpu.vector_store %arg8[%c0_37, %c16_38, %c0_39], %37 {strides = array<i32>} : memref<2x64x128xf32, #tpu.memory_space<vmem>>, vector<2x8x128xf32>,
    %c0_40 = arith.constant 0 : index
    %c24 = arith.constant 24 : index
    %c0_41 = arith.constant 0 : index
    %39 = vector.load %arg8[%c0_40, %c24, %c0_41] : memref<2x64x128xf32, #tpu.memory_space<vmem>>, vector<2x8x128xf32>
    %c0_i32_42 = arith.constant 0 : i32
    %c128_i32_43 = arith.constant 128 : i32
    %40 = arith.muli %c0_i32_42, %c128_i32_43 : i32
    %41 = tpu.assume_multiple %40, 128 : i32
    %c0_44 = arith.constant 0 : index
    %c24_45 = arith.constant 24 : index
    %42 = arith.index_cast %41 : i32 to index
    %43 = vector.load %arg2[%c0_44, %c24_45, %42] : memref<2x64x256xf32, #tpu.memory_space<vmem>>, vector<2x8x128xf32>
    %44 = arith.addf %39, %43 : vector<2x8x128xf32>
    %c1_i32_46 = arith.constant 1 : i32
    %c128_i32_47 = arith.constant 128 : i32
    %45 = arith.muli %c1_i32_46, %c128_i32_47 : i32
    %46 = tpu.assume_multiple %45, 128 : i32
    %c0_48 = arith.constant 0 : index
    %c24_49 = arith.constant 24 : index
    %47 = arith.index_cast %46 : i32 to index
    %48 = vector.load %arg2[%c0_48, %c24_49, %47] : memref<2x64x256xf32, #tpu.memory_space<vmem>>, vector<2x8x128xf32>
    %49 = arith.addf %44, %48 : vector<2x8x128xf32>
    %c2_i32_50 = arith.constant 2 : i32
    %c0_51 = arith.constant 0 : index
    %c24_52 = arith.constant 24 : index
    %c0_53 = arith.constant 0 : index
    %50 = vector.load %arg8[%c0_51, %c24_52, %c0_53] : memref<2x64x128xf32, #tpu.memory_space<vmem>>, vector<2x8x128xf32>
    tpu.vector_store %arg8[%c0_51, %c24_52, %c0_53], %49 {strides = array<i32>} : memref<2x64x128xf32, #tpu.memory_space<vmem>>, vector<2x8x128xf32>,
    %c0_54 = arith.constant 0 : index
    %c32 = arith.constant 32 : index
    %c0_55 = arith.constant 0 : index
    %51 = vector.load %arg8[%c0_54, %c32, %c0_55] : memref<2x64x128xf32, #tpu.memory_space<vmem>>, vector<2x8x128xf32>
    %c0_i32_56 = arith.constant 0 : i32
    %c128_i32_57 = arith.constant 128 : i32
    %52 = arith.muli %c0_i32_56, %c128_i32_57 : i32
    %53 = tpu.assume_multiple %52, 128 : i32
    %c0_58 = arith.constant 0 : index
    %c32_59 = arith.constant 32 : index
    %54 = arith.index_cast %53 : i32 to index
    %55 = vector.load %arg2[%c0_58, %c32_59, %54] : memref<2x64x256xf32, #tpu.memory_space<vmem>>, vector<2x8x128xf32>
    %56 = arith.addf %51, %55 : vector<2x8x128xf32>
    %c1_i32_60 = arith.constant 1 : i32
    %c128_i32_61 = arith.constant 128 : i32
    %57 = arith.muli %c1_i32_60, %c128_i32_61 : i32
    %58 = tpu.assume_multiple %57, 128 : i32
    %c0_62 = arith.constant 0 : index
    %c32_63 = arith.constant 32 : index
    %59 = arith.index_cast %58 : i32 to index
    %60 = vector.load %arg2[%c0_62, %c32_63, %59] : memref<2x64x256xf32, #tpu.memory_space<vmem>>, vector<2x8x128xf32>
    %61 = arith.addf %56, %60 : vector<2x8x128xf32>
    %c2_i32_64 = arith.constant 2 : i32
    %c0_65 = arith.constant 0 : index
    %c32_66 = arith.constant 32 : index
    %c0_67 = arith.constant 0 : index
    %62 = vector.load %arg8[%c0_65, %c32_66, %c0_67] : memref<2x64x128xf32, #tpu.memory_space<vmem>>, vector<2x8x128xf32>
    tpu.vector_store %arg8[%c0_65, %c32_66, %c0_67], %61 {strides = array<i32>} : memref<2x64x128xf32, #tpu.memory_space<vmem>>, vector<2x8x128xf32>,
    %c0_68 = arith.constant 0 : index
    %c40 = arith.constant 40 : index
    %c0_69 = arith.constant 0 : index
    %63 = vector.load %arg8[%c0_68, %c40, %c0_69] : memref<2x64x128xf32, #tpu.memory_space<vmem>>, vector<2x8x128xf32>
    %c0_i32_70 = arith.constant 0 : i32
    %c128_i32_71 = arith.constant 128 : i32
    %64 = arith.muli %c0_i32_70, %c128_i32_71 : i32
    %65 = tpu.assume_multiple %64, 128 : i32
    %c0_72 = arith.constant 0 : index
    %c40_73 = arith.constant 40 : index
    %66 = arith.index_cast %65 : i32 to index
    %67 = vector.load %arg2[%c0_72, %c40_73, %66] : memref<2x64x256xf32, #tpu.memory_space<vmem>>, vector<2x8x128xf32>
    %68 = arith.addf %63, %67 : vector<2x8x128xf32>
    %c1_i32_74 = arith.constant 1 : i32
    %c128_i32_75 = arith.constant 128 : i32
    %69 = arith.muli %c1_i32_74, %c128_i32_75 : i32
    %70 = tpu.assume_multiple %69, 128 : i32
    %c0_76 = arith.constant 0 : index
    %c40_77 = arith.constant 40 : index
    %71 = arith.index_cast %70 : i32 to index
    %72 = vector.load %arg2[%c0_76, %c40_77, %71] : memref<2x64x256xf32, #tpu.memory_space<vmem>>, vector<2x8x128xf32>
    %73 = arith.addf %68, %72 : vector<2x8x128xf32>
    %c2_i32_78 = arith.constant 2 : i32
    %c0_79 = arith.constant 0 : index
    %c40_80 = arith.constant 40 : index
    %c0_81 = arith.constant 0 : index
    %74 = vector.load %arg8[%c0_79, %c40_80, %c0_81] : memref<2x64x128xf32, #tpu.memory_space<vmem>>, vector<2x8x128xf32>
    tpu.vector_store %arg8[%c0_79, %c40_80, %c0_81], %73 {strides = array<i32>} : memref<2x64x128xf32, #tpu.memory_space<vmem>>, vector<2x8x128xf32>,
    %c0_82 = arith.constant 0 : index
    %c48 = arith.constant 48 : index
    %c0_83 = arith.constant 0 : index
    %75 = vector.load %arg8[%c0_82, %c48, %c0_83] : memref<2x64x128xf32, #tpu.memory_space<vmem>>, vector<2x8x128xf32>
    %c0_i32_84 = arith.constant 0 : i32
    %c128_i32_85 = arith.constant 128 : i32
    %76 = arith.muli %c0_i32_84, %c128_i32_85 : i32
    %77 = tpu.assume_multiple %76, 128 : i32
    %c0_86 = arith.constant 0 : index
    %c48_87 = arith.constant 48 : index
    %78 = arith.index_cast %77 : i32 to index
    %79 = vector.load %arg2[%c0_86, %c48_87, %78] : memref<2x64x256xf32, #tpu.memory_space<vmem>>, vector<2x8x128xf32>
    %80 = arith.addf %75, %79 : vector<2x8x128xf32>
    %c1_i32_88 = arith.constant 1 : i32
    %c128_i32_89 = arith.constant 128 : i32
    %81 = arith.muli %c1_i32_88, %c128_i32_89 : i32
    %82 = tpu.assume_multiple %81, 128 : i32
    %c0_90 = arith.constant 0 : index
    %c48_91 = arith.constant 48 : index
    %83 = arith.index_cast %82 : i32 to index
    %84 = vector.load %arg2[%c0_90, %c48_91, %83] : memref<2x64x256xf32, #tpu.memory_space<vmem>>, vector<2x8x128xf32>
    %85 = arith.addf %80, %84 : vector<2x8x128xf32>
    %c2_i32_92 = arith.constant 2 : i32
    %c0_93 = arith.constant 0 : index
    %c48_94 = arith.constant 48 : index
    %c0_95 = arith.constant 0 : index
    %86 = vector.load %arg8[%c0_93, %c48_94, %c0_95] : memref<2x64x128xf32, #tpu.memory_space<vmem>>, vector<2x8x128xf32>
    tpu.vector_store %arg8[%c0_93, %c48_94, %c0_95], %85 {strides = array<i32>} : memref<2x64x128xf32, #tpu.memory_space<vmem>>, vector<2x8x128xf32>,
    %c0_96 = arith.constant 0 : index
    %c56 = arith.constant 56 : index
    %c0_97 = arith.constant 0 : index
    %87 = vector.load %arg8[%c0_96, %c56, %c0_97] : memref<2x64x128xf32, #tpu.memory_space<vmem>>, vector<2x8x128xf32>
    %c0_i32_98 = arith.constant 0 : i32
    %c128_i32_99 = arith.constant 128 : i32
    %88 = arith.muli %c0_i32_98, %c128_i32_99 : i32
    %89 = tpu.assume_multiple %88, 128 : i32
    %c0_100 = arith.constant 0 : index
    %c56_101 = arith.constant 56 : index
    %90 = arith.index_cast %89 : i32 to index
    %91 = vector.load %arg2[%c0_100, %c56_101, %90] : memref<2x64x256xf32, #tpu.memory_space<vmem>>, vector<2x8x128xf32>
    %92 = arith.addf %87, %91 : vector<2x8x128xf32>
    %c1_i32_102 = arith.constant 1 : i32
    %c128_i32_103 = arith.constant 128 : i32
    %93 = arith.muli %c1_i32_102, %c128_i32_103 : i32
    %94 = tpu.assume_multiple %93, 128 : i32
    %c0_104 = arith.constant 0 : index
    %c56_105 = arith.constant 56 : index
    %95 = arith.index_cast %94 : i32 to index
    %96 = vector.load %arg2[%c0_104, %c56_105, %95] : memref<2x64x256xf32, #tpu.memory_space<vmem>>, vector<2x8x128xf32>
    %97 = arith.addf %92, %96 : vector<2x8x128xf32>
    %c2_i32_106 = arith.constant 2 : i32
    %c0_107 = arith.constant 0 : index
    %c56_108 = arith.constant 56 : index
    %c0_109 = arith.constant 0 : index
    %98 = vector.load %arg8[%c0_107, %c56_108, %c0_109] : memref<2x64x128xf32, #tpu.memory_space<vmem>>, vector<2x8x128xf32>
    tpu.vector_store %arg8[%c0_107, %c56_108, %c0_109], %97 {strides = array<i32>} : memref<2x64x128xf32, #tpu.memory_space<vmem>>, vector<2x8x128xf32>,
    %c0_i32_110 = arith.constant 0 : i32
    %99 = arith.cmpi eq, %arg1, %c0_i32_110 : i32
    %100 = arith.extui %99 : i1 to i32
    %c0_i32_111 = arith.constant 0 : i32
    %101 = arith.cmpi ne, %100, %c0_i32_111 : i32
    scf.if %101 {
      %c0_112 = arith.constant 0 : index
      %c0_113 = arith.constant 0 : index
      %c0_114 = arith.constant 0 : index
      %102 = vector.load %arg8[%c0_112, %c0_113, %c0_114] : memref<2x64x128xf32, #tpu.memory_space<vmem>>, vector<2x64x128xf32>
      %cst = arith.constant dense<0.000000e+00> : vector<2x64xf32>
      %103 = vector.multi_reduction <add>, %102, %cst [2] : vector<2x64x128xf32> to vector<2x64xf32>
      %cst_115 = arith.constant 3.906250e-03 : f32
      %104 = vector.broadcast %cst_115 : f32 to vector<2x64xf32>
      %105 = arith.mulf %103, %104 : vector<2x64xf32>
      %c0_116 = arith.constant 0 : index
      %c0_117 = arith.constant 0 : index
      %106 = vector.load %arg3[%c0_116, %c0_117] : memref<64x4xf32, #tpu.memory_space<vmem>>, vector<64x4xf32>
      %cst_118 = arith.constant dense<0.000000e+00> : vector<2x4xf32>
      %107 = tpu.matmul %105, %106, %cst_118 {dimension_numbers = #tpu.dot_dimension_numbers<[1], [0], [0], [1], [0, 0, 1, 1], [], []>} : vector<2x64xf32>, vector<64x4xf32>, vector<2x4xf32> -> vector<2x4xf32>
      %c0_119 = arith.constant 0 : index
      %c0_120 = arith.constant 0 : index
      %108 = vector.load %arg4[%c0_119, %c0_120] : memref<1x4xf32, #tpu.memory_space<vmem>>, vector<1x4xf32>
      %109 = vector.broadcast %108 : vector<1x4xf32> to vector<2x4xf32>
      %110 = arith.addf %107, %109 : vector<2x4xf32>
      %cst_121 = arith.constant 0.000000e+00 : f32
      %111 = vector.broadcast %cst_121 : f32 to vector<2x4xf32>
      %112 = arith.maximumf %110, %111 : vector<2x4xf32>
      %c0_122 = arith.constant 0 : index
      %c0_123 = arith.constant 0 : index
      %113 = vector.load %arg5[%c0_122, %c0_123] : memref<4x64xf32, #tpu.memory_space<vmem>>, vector<4x64xf32>
      %cst_124 = arith.constant dense<0.000000e+00> : vector<2x64xf32>
      %114 = tpu.matmul %112, %113, %cst_124 {dimension_numbers = #tpu.dot_dimension_numbers<[1], [0], [0], [1], [0, 0, 1, 1], [], []>} : vector<2x4xf32>, vector<4x64xf32>, vector<2x64xf32> -> vector<2x64xf32>
      %c0_125 = arith.constant 0 : index
      %c0_126 = arith.constant 0 : index
      %115 = vector.load %arg6[%c0_125, %c0_126] : memref<1x64xf32, #tpu.memory_space<vmem>>, vector<1x64xf32>
      %116 = vector.broadcast %115 : vector<1x64xf32> to vector<2x64xf32>
      %117 = arith.addf %114, %116 : vector<2x64xf32>
      %118 = arith.negf %117 : vector<2x64xf32>
      %119 = math.exp %118 : vector<2x64xf32>
      %cst_127 = arith.constant 1.000000e+00 : f32
      %120 = vector.broadcast %cst_127 : f32 to vector<2x64xf32>
      %121 = arith.addf %120, %119 : vector<2x64xf32>
      %122 = arith.divf %120, %121 : vector<2x64xf32>
      %c0_128 = arith.constant 0 : index
      %c0_129 = arith.constant 0 : index
      %123 = vector.load %arg7[%c0_128, %c0_129] : memref<2x64xf32, #tpu.memory_space<vmem>>, vector<2x64xf32>
      tpu.vector_store %arg7[%c0_128, %c0_129], %122 {strides = array<i32>} : memref<2x64xf32, #tpu.memory_space<vmem>>, vector<2x64xf32>,
    } else {
    }
    return
  }
  func.func @transform_0(%arg0: i32, %arg1: i32) -> (i32, i32, i32) {
    %c0_i32 = arith.constant 0 : i32
    %c0_i32_0 = arith.constant 0 : i32
    return %arg0, %c0_i32, %arg1 : i32, i32, i32
  }
  func.func @transform_1(%arg0: i32, %arg1: i32) -> (i32, i32) {
    %c0_i32 = arith.constant 0 : i32
    %c0_i32_0 = arith.constant 0 : i32
    %c0_i32_1 = arith.constant 0 : i32
    return %c0_i32, %c0_i32_0 : i32, i32
  }
  func.func @transform_2(%arg0: i32, %arg1: i32) -> (i32, i32) {
    %c0_i32 = arith.constant 0 : i32
    %c0_i32_0 = arith.constant 0 : i32
    %c0_i32_1 = arith.constant 0 : i32
    return %c0_i32, %c0_i32_0 : i32, i32
  }
  func.func @transform_3(%arg0: i32, %arg1: i32) -> (i32, i32) {
    %c0_i32 = arith.constant 0 : i32
    %c0_i32_0 = arith.constant 0 : i32
    %c0_i32_1 = arith.constant 0 : i32
    return %c0_i32, %c0_i32_0 : i32, i32
  }
  func.func @transform_4(%arg0: i32, %arg1: i32) -> (i32, i32) {
    %c0_i32 = arith.constant 0 : i32
    %c0_i32_0 = arith.constant 0 : i32
    %c0_i32_1 = arith.constant 0 : i32
    return %c0_i32, %c0_i32_0 : i32, i32
  }
  func.func @transform_5(%arg0: i32, %arg1: i32) -> (i32, i32) {
    %c0_i32 = arith.constant 0 : i32
    %c0_i32_0 = arith.constant 0 : i32
    return %arg0, %c0_i32 : i32, i32
  }
}

</mosaic_0001>

<llo_original>
// kernel: tpu_custom_call.1
$region0: #{tpu_custom_call.1}
  #allocation0 [shape = 'u32[]', space=smem, size = 0x4, offset = 0x4, fixed_abs, tag = 'smem constant byte address 0x4 - core index']
  #allocation1 [shape = 'u32[144,128]{1,0:T(1,128)}', space=vmem, size = 0x12000, scoped, tag = 'internal scratch']
  #allocation2 [shape = 'f32[2,64,128]{2,1,0:T(8,128)}', space=vmem, size = 0x10000, scoped, tag = 'scratch operand']
  %s0 = inlined_call_operand.hbm [shape: f32[2,64,256], index: 0, kind: input, shape index: {}]
  %s1 = inlined_call_operand.vmem [shape: f32[64,4], index: 1, kind: input, shape index: {}]
  %s2 = inlined_call_operand.vmem [shape: f32[1,4], index: 2, kind: input, shape index: {}]
  %s3 = inlined_call_operand.vmem [shape: f32[4,64], index: 3, kind: input, shape index: {}]
  %s4 = inlined_call_operand.vmem [shape: f32[1,64], index: 4, kind: input, shape index: {}]
  %s5 = inlined_call_operand.hbm [shape: f32[2,64], index: 5, kind: output, shape index: {}]
  %s6 = sld [smem:[#allocation0]]
  $region42: #{tpu_custom_call.1} parent=0
    _
  %s8 = ssub.s32 1, %s6
  %s9 = scalar_select 0, %s8, %s6
  $region1: #{tpu_custom_call.1} parent=0
    #allocation3 [shape = 'u8[131072]{0}', space=vmem, size = 0x20000, scoped, tag = 'input window, operand 0, single buffered']
    #allocation4 [shape = 's32[1]{0}', space=sflag, size = 0x4, scoped, tag = 'scoped memory for tpu_custom_call.1']
    #allocation5 [shape = 's32[1]{0}', space=sflag, size = 0x4, scoped, tag = 'scoped memory for tpu_custom_call.1']
    #allocation6 [shape = 'u8[1024]{0}', space=vmem, size = 0x400, scoped, tag = 'output window, operand 0, single buffered']
    %10 = vsyncpa [#allocation4], 0
    %11 = vsyncpa [#allocation5], 0
    // Predicated region
    $region2: #{tpu_custom_call.1} parent=1 // pred_check
      _
    $region3: #{tpu_custom_call.1} parent=1 // pred_check_branch
      %13 = sbr.rel (0) target = $region5
    $region4: #{tpu_custom_call.1} parent=1 // pred_region
      %s15 = ssub.s32 4096, 4096
      %16 = vsyncadd [#allocation4], %s15
      %s17 = sshll.u32 [#allocation3], 4
      %s18 = int_to_ptr.vmem [resolvable:$true] %s17
      %23 = dma.hbm_to_vmem [thread:$0]  %s0, 4096, %s18, [#allocation4], 256, 256, 16
    $region5: #{tpu_custom_call.1} parent=1 // pred_fallthru
      _
    // Predicated region
    $region6: #{tpu_custom_call.1} parent=1 // pred_check
      _
    $region7: #{tpu_custom_call.1} parent=1 // pred_check_branch
      %25 = sbr.rel (0) target = $region9
    $region8: #{tpu_custom_call.1} parent=1 // pred_region
      _
    $region9: #{tpu_custom_call.1} parent=1 // pred_fallthru
      _
    // Predicated region
    $region10: #{tpu_custom_call.1} parent=1 // pred_check
      _
    $region11: #{tpu_custom_call.1} parent=1 // pred_check_branch
      %27 = sbr.rel (0) target = $region13
    $region12: #{tpu_custom_call.1} parent=1 // pred_region
      _
    $region13: #{tpu_custom_call.1} parent=1 // pred_fallthru
      _
    // Predicated region
    $region14: #{tpu_custom_call.1} parent=1 // pred_check
      _
    $region15: #{tpu_custom_call.1} parent=1 // pred_check_branch
      %29 = sbr.rel (0) target = $region17
    $region16: #{tpu_custom_call.1} parent=1 // pred_region
      _
    $region17: #{tpu_custom_call.1} parent=1 // pred_fallthru
      _
    // Predicated region
    $region18: #{tpu_custom_call.1} parent=1 // pred_check
      _
    $region19: #{tpu_custom_call.1} parent=1 // pred_check_branch
      %31 = sbr.rel (0) target = $region21
    $region20: #{tpu_custom_call.1} parent=1 // pred_region
      _
    $region21: #{tpu_custom_call.1} parent=1 // pred_fallthru
      _
    // Predicated region
    $region22: #{tpu_custom_call.1} parent=1 // pred_check
      _
    $region23: #{tpu_custom_call.1} parent=1 // pred_check_branch
      %33 = sbr.rel (0) target = $region25
    $region24: #{tpu_custom_call.1} parent=1 // pred_region
      %34 = dma.done [#allocation4], 4096
    $region25: #{tpu_custom_call.1} parent=1 // pred_fallthru
      _
    %p35 = scmp.eq.s32.totalorder 0, 0
    // Predicated region
    $region26: #{tpu_custom_call.1} parent=1 // pred_check
      %p36 = pneg %p35
    $region27: #{tpu_custom_call.1} parent=1 // pred_check_branch
      %38 = sbr.rel (%p36) target = $region29
    $region28: #{tpu_custom_call.1} parent=1 // pred_region
      %39 = vst [vmem:[#allocation2] sm:$0xff] 0.0
      %40 = vst [vmem:[#allocation2 + $0x8] sm:$0xff] 0.0
      %41 = vst [vmem:[#allocation2 + $0x10] sm:$0xff] 0.0
      %42 = vst [vmem:[#allocation2 + $0x18] sm:$0xff] 0.0
      %43 = vst [vmem:[#allocation2 + $0x20] sm:$0xff] 0.0
      %44 = vst [vmem:[#allocation2 + $0x28] sm:$0xff] 0.0
      %45 = vst [vmem:[#allocation2 + $0x30] sm:$0xff] 0.0
      %46 = vst [vmem:[#allocation2 + $0x38] sm:$0xff] 0.0
      %47 = vst [vmem:[#allocation2 + $0x40] sm:$0xff] 0.0
      %48 = vst [vmem:[#allocation2 + $0x48] sm:$0xff] 0.0
      %49 = vst [vmem:[#allocation2 + $0x50] sm:$0xff] 0.0
      %50 = vst [vmem:[#allocation2 + $0x58] sm:$0xff] 0.0
      %51 = vst [vmem:[#allocation2 + $0x60] sm:$0xff] 0.0
      %52 = vst [vmem:[#allocation2 + $0x68] sm:$0xff] 0.0
      %53 = vst [vmem:[#allocation2 + $0x70] sm:$0xff] 0.0
      %54 = vst [vmem:[#allocation2 + $0x78] sm:$0xff] 0.0
    $region29: #{tpu_custom_call.1} parent=1 // pred_fallthru
      _
    %v55 = vld [vmem:[#allocation2] sm:$0xff]
    %v56 = vld [vmem:[#allocation2 + $0x40] sm:$0xff]
    %v57 = vld [vmem:[#allocation3] sm:$0xff]
    %v58 = vld [vmem:[#allocation3 + $0x80] sm:$0xff]
    %v59 = vadd.f32 %v55, %v57
    %v60 = vadd.f32 %v56, %v58
    %s61 = scalar_lea.vmem [#allocation3], 8
    %v62 = vld [vmem:[%s61] sm:$0xff]
    %v63 = vld [vmem:[%s61 + $0x80] sm:$0xff]
    %v64 = vadd.f32 %v59, %v62
    %v65 = vadd.f32 %v60, %v63
    %66 = vst [vmem:[#allocation2] sm:$0xff] %v64
    %67 = vst [vmem:[#allocation2 + $0x40] sm:$0xff] %v65
    %v68 = vld [vmem:[#allocation2 + $0x8] sm:$0xff]
    %v69 = vld [vmem:[#allocation2 + $0x48] sm:$0xff]
    %v70 = vld [vmem:[#allocation3 + $0x10] sm:$0xff]
    %v71 = vld [vmem:[#allocation3 + $0x90] sm:$0xff]
    %v72 = vadd.f32 %v68, %v70
    %v73 = vadd.f32 %v69, %v71
    %v74 = vld [vmem:[%s61 + $0x10] sm:$0xff]
    %v75 = vld [vmem:[%s61 + $0x90] sm:$0xff]
    %v76 = vadd.f32 %v72, %v74
    %v77 = vadd.f32 %v73, %v75
    %78 = vst [vmem:[#allocation2 + $0x8] sm:$0xff] %v76
    %79 = vst [vmem:[#allocation2 + $0x48] sm:$0xff] %v77
    %v80 = vld [vmem:[#allocation2 + $0x10] sm:$0xff]
    %v81 = vld [vmem:[#allocation2 + $0x50] sm:$0xff]
    %v82 = vld [vmem:[#allocation3 + $0x20] sm:$0xff]
    %v83 = vld [vmem:[#allocation3 + $0xa0] sm:$0xff]
    %v84 = vadd.f32 %v80, %v82
    %v85 = vadd.f32 %v81, %v83
    %v86 = vld [vmem:[%s61 + $0x20] sm:$0xff]
    %v87 = vld [vmem:[%s61 + $0xa0] sm:$0xff]
    %v88 = vadd.f32 %v84, %v86
    %v89 = vadd.f32 %v85, %v87
    %90 = vst [vmem:[#allocation2 + $0x10] sm:$0xff] %v88
    %91 = vst [vmem:[#allocation2 + $0x50] sm:$0xff] %v89
    %v92 = vld [vmem:[#allocation2 + $0x18] sm:$0xff]
    %v93 = vld [vmem:[#allocation2 + $0x58] sm:$0xff]
    %v94 = vld [vmem:[#allocation3 + $0x30] sm:$0xff]
    %v95 = vld [vmem:[#allocation3 + $0xb0] sm:$0xff]
    %v96 = vadd.f32 %v92, %v94
    %v97 = vadd.f32 %v93, %v95
    %v98 = vld [vmem:[%s61 + $0x30] sm:$0xff]
    %v99 = vld [vmem:[%s61 + $0xb0] sm:$0xff]
    %v100 = vadd.f32 %v96, %v98
    %v101 = vadd.f32 %v97, %v99
    %102 = vst [vmem:[#allocation2 + $0x18] sm:$0xff] %v100
    %103 = vst [vmem:[#allocation2 + $0x58] sm:$0xff] %v101
    %v104 = vld [vmem:[#allocation2 + $0x20] sm:$0xff]
    %v105 = vld [vmem:[#allocation2 + $0x60] sm:$0xff]
    %v106 = vld [vmem:[#allocation3 + $0x40] sm:$0xff]
    %v107 = vld [vmem:[#allocation3 + $0xc0] sm:$0xff]
    %v108 = vadd.f32 %v104, %v106
    %v109 = vadd.f32 %v105, %v107
    %v110 = vld [vmem:[%s61 + $0x40] sm:$0xff]
    %v111 = vld [vmem:[%s61 + $0xc0] sm:$0xff]
    %v112 = vadd.f32 %v108, %v110
    %v113 = vadd.f32 %v109, %v111
    %114 = vst [vmem:[#allocation2 + $0x20] sm:$0xff] %v112
    %115 = vst [vmem:[#allocation2 + $0x60] sm:$0xff] %v113
    %v116 = vld [vmem:[#allocation2 + $0x28] sm:$0xff]
    %v117 = vld [vmem:[#allocation2 + $0x68] sm:$0xff]
    %v118 = vld [vmem:[#allocation3 + $0x50] sm:$0xff]
    %v119 = vld [vmem:[#allocation3 + $0xd0] sm:$0xff]
    %v120 = vadd.f32 %v116, %v118
    %v121 = vadd.f32 %v117, %v119
    %v122 = vld [vmem:[%s61 + $0x50] sm:$0xff]
    %v123 = vld [vmem:[%s61 + $0xd0] sm:$0xff]
    %v124 = vadd.f32 %v120, %v122
    %v125 = vadd.f32 %v121, %v123
    %126 = vst [vmem:[#allocation2 + $0x28] sm:$0xff] %v124
    %127 = vst [vmem:[#allocation2 + $0x68] sm:$0xff] %v125
    %v128 = vld [vmem:[#allocation2 + $0x30] sm:$0xff]
    %v129 = vld [vmem:[#allocation2 + $0x70] sm:$0xff]
    %v130 = vld [vmem:[#allocation3 + $0x60] sm:$0xff]
    %v131 = vld [vmem:[#allocation3 + $0xe0] sm:$0xff]
    %v132 = vadd.f32 %v128, %v130
    %v133 = vadd.f32 %v129, %v131
    %v134 = vld [vmem:[%s61 + $0x60] sm:$0xff]
    %v135 = vld [vmem:[%s61 + $0xe0] sm:$0xff]
    %v136 = vadd.f32 %v132, %v134
    %v137 = vadd.f32 %v133, %v135
    %138 = vst [vmem:[#allocation2 + $0x30] sm:$0xff] %v136
    %139 = vst [vmem:[#allocation2 + $0x70] sm:$0xff] %v137
    %v140 = vld [vmem:[#allocation2 + $0x38] sm:$0xff]
    %v141 = vld [vmem:[#allocation2 + $0x78] sm:$0xff]
    %v142 = vld [vmem:[#allocation3 + $0x70] sm:$0xff]
    %v143 = vld [vmem:[#allocation3 + $0xf0] sm:$0xff]
    %v144 = vadd.f32 %v140, %v142
    %v145 = vadd.f32 %v141, %v143
    %v146 = vld [vmem:[%s61 + $0x70] sm:$0xff]
    %v147 = vld [vmem:[%s61 + $0xf0] sm:$0xff]
    %v148 = vadd.f32 %v144, %v146
    %v149 = vadd.f32 %v145, %v147
    %150 = vst [vmem:[#allocation2 + $0x38] sm:$0xff] %v148
    %151 = vst [vmem:[#allocation2 + $0x78] sm:$0xff] %v149
    // Predicated region
    $region30: #{tpu_custom_call.1} parent=1 // pred_check
      %p152 = pneg %p35
    $region31: #{tpu_custom_call.1} parent=1 // pred_check_branch
      %154 = sbr.rel (%p152) target = $region33
    $region32: #{tpu_custom_call.1} parent=1 // pred_region
      %v155 = vld [vmem:[#allocation2] sm:$0xff]
      %v156 = vld [vmem:[#allocation2 + $0x8] sm:$0xff]
      %v157 = vld [vmem:[#allocation2 + $0x10] sm:$0xff]
      %v158 = vld [vmem:[#allocation2 + $0x18] sm:$0xff]
      %v159 = vld [vmem:[#allocation2 + $0x20] sm:$0xff]
      %v160 = vld [vmem:[#allocation2 + $0x28] sm:$0xff]
      %v161 = vld [vmem:[#allocation2 + $0x30] sm:$0xff]
      %v162 = vld [vmem:[#allocation2 + $0x38] sm:$0xff]
      %v163 = vld [vmem:[#allocation2 + $0x40] sm:$0xff]
      %v164 = vld [vmem:[#allocation2 + $0x48] sm:$0xff]
      %v165 = vld [vmem:[#allocation2 + $0x50] sm:$0xff]
      %v166 = vld [vmem:[#allocation2 + $0x58] sm:$0xff]
      %v167 = vld [vmem:[#allocation2 + $0x60] sm:$0xff]
      %v168 = vld [vmem:[#allocation2 + $0x68] sm:$0xff]
      %v169 = vld [vmem:[#allocation2 + $0x70] sm:$0xff]
      %v170 = vld [vmem:[#allocation2 + $0x78] sm:$0xff]
      %171 = vadd.xlane.f32.xlu0 %v155
      %v172 = vpop.xlane.xlu0 %171
      %173 = vadd.xlane.f32.xlu0 %v156
      %v174 = vpop.xlane.xlu0 %173
      %175 = vadd.xlane.f32.xlu0 %v157
      %v176 = vpop.xlane.xlu0 %175
      %177 = vadd.xlane.f32.xlu0 %v158
      %v178 = vpop.xlane.xlu0 %177
      %179 = vadd.xlane.f32.xlu0 %v159
      %v180 = vpop.xlane.xlu0 %179
      %181 = vadd.xlane.f32.xlu0 %v160
      %v182 = vpop.xlane.xlu0 %181
      %183 = vadd.xlane.f32.xlu0 %v161
      %v184 = vpop.xlane.xlu0 %183
      %185 = vadd.xlane.f32.xlu0 %v162
      %v186 = vpop.xlane.xlu0 %185
      %187 = vadd.xlane.f32.xlu0 %v163
      %v188 = vpop.xlane.xlu0 %187
      %189 = vadd.xlane.f32.xlu0 %v164
      %v190 = vpop.xlane.xlu0 %189
      %191 = vadd.xlane.f32.xlu0 %v165
      %v192 = vpop.xlane.xlu0 %191
      %193 = vadd.xlane.f32.xlu0 %v166
      %v194 = vpop.xlane.xlu0 %193
      %195 = vadd.xlane.f32.xlu0 %v167
      %v196 = vpop.xlane.xlu0 %195
      %197 = vadd.xlane.f32.xlu0 %v168
      %v198 = vpop.xlane.xlu0 %197
      %199 = vadd.xlane.f32.xlu0 %v169
      %v200 = vpop.xlane.xlu0 %199
      %201 = vadd.xlane.f32.xlu0 %v170
      %v202 = vpop.xlane.xlu0 %201
      %v203 = vmul.f32 %v172, 0.00390625
      %v204 = vmul.f32 %v174, 0.00390625
      %v205 = vmul.f32 %v176, 0.00390625
      %v206 = vmul.f32 %v178, 0.00390625
      %v207 = vmul.f32 %v180, 0.00390625
      %v208 = vmul.f32 %v182, 0.00390625
      %v209 = vmul.f32 %v184, 0.00390625
      %v210 = vmul.f32 %v186, 0.00390625
      %v211 = vmul.f32 %v188, 0.00390625
      %v212 = vmul.f32 %v190, 0.00390625
      %v213 = vmul.f32 %v192, 0.00390625
      %v214 = vmul.f32 %v194, 0.00390625
      %v215 = vmul.f32 %v196, 0.00390625
      %v216 = vmul.f32 %v198, 0.00390625
      %v217 = vmul.f32 %v200, 0.00390625
      %v218 = vmul.f32 %v202, 0.00390625
      %v219 = vld [vmem:[%s1] sm:$0xff]
      %v220 = vld [vmem:[%s1 + $0x8] sm:$0xff]
      %v221 = vld [vmem:[%s1 + $0x10] sm:$0xff]
      %v222 = vld [vmem:[%s1 + $0x18] sm:$0xff]
      %v223 = vld [vmem:[%s1 + $0x20] sm:$0xff]
      %v224 = vld [vmem:[%s1 + $0x28] sm:$0xff]
      %v225 = vld [vmem:[%s1 + $0x30] sm:$0xff]
      %v226 = vld [vmem:[%s1 + $0x38] sm:$0xff]
      %v227 = vld [vmem:[%s2] sm:$0x1]
      %v229 = vlaneseq
      %v230 = vshrl.u32 %v229, 7
      %v231 = vsub.s32 0, %v230
      %v232 = vrot.slane %v227, %v231
      %v250 = vlaneseq
      %v251 = vand.u32 %v250, 127
      %v252 = vlaneseq
      %v253 = vshrl.u32 %v252, 7
      %v254 = vsub.s32 %v251, %v253
      %v255 = vrot.slane %v203, %v254
      %v256 = vadd.s32 %v251, 4294967288
      %v257 = vlaneseq
      %v258 = vshrl.u32 %v257, 7
      %v259 = vsub.s32 %v256, %v258
      %v260 = vrot.slane %v204, %v259
      %vm261 = vcmask 130112
      %v262 = vsel %vm261, %v260, %v255
      %v263 = vadd.s32 %v251, 4294967280
      %v264 = vlaneseq
      %v265 = vshrl.u32 %v264, 7
      %v266 = vsub.s32 %v263, %v265
      %v267 = vrot.slane %v205, %v266
      %vm268 = vcmask 195712
      %v269 = vsel %vm268, %v267, %v262
      %v270 = vadd.s32 %v251, 4294967272
      %v271 = vlaneseq
      %v272 = vshrl.u32 %v271, 7
      %v273 = vsub.s32 %v270, %v272
      %v274 = vrot.slane %v206, %v273
      %vm275 = vcmask 261312
      %v276 = vsel %vm275, %v274, %v269
      %v277 = vadd.s32 %v251, 4294967264
      %v278 = vlaneseq
      %v279 = vshrl.u32 %v278, 7
      %v280 = vsub.s32 %v277, %v279
      %v281 = vrot.slane %v207, %v280
      %vm282 = vcmask 326912
      %v283 = vsel %vm282, %v281, %v276
      %v284 = vadd.s32 %v251, 4294967256
      %v285 = vlaneseq
      %v286 = vshrl.u32 %v285, 7
      %v287 = vsub.s32 %v284, %v286
      %v288 = vrot.slane %v208, %v287
      %vm289 = vcmask 392512
      %v290 = vsel %vm289, %v288, %v283
      %v291 = vadd.s32 %v251, 4294967248
      %v292 = vlaneseq
      %v293 = vshrl.u32 %v292, 7
      %v294 = vsub.s32 %v291, %v293
      %v295 = vrot.slane %v209, %v294
      %vm296 = vcmask 458112
      %v297 = vsel %vm296, %v295, %v290
      %v298 = vadd.s32 %v251, 4294967240
      %v299 = vlaneseq
      %v300 = vshrl.u32 %v299, 7
      %v301 = vsub.s32 %v298, %v300
      %v302 = vrot.slane %v210, %v301
      %vm303 = vcmask 523712
      %v304 = vsel %vm303, %v302, %v297
      %v305 = vlaneseq
      %v306 = vshrl.u32 %v305, 7
      %v307 = vsub.s32 %v251, %v306
      %v308 = vrot.slane %v211, %v307
      %v309 = vlaneseq
      %v310 = vshrl.u32 %v309, 7
      %v311 = vsub.s32 %v256, %v310
      %v312 = vrot.slane %v212, %v311
      %v313 = vsel %vm261, %v312, %v308
      %v314 = vlaneseq
      %v315 = vshrl.u32 %v314, 7
      %v316 = vsub.s32 %v263, %v315
      %v317 = vrot.slane %v213, %v316
      %v318 = vsel %vm268, %v317, %v313
      %v319 = vlaneseq
      %v320 = vshrl.u32 %v319, 7
      %v321 = vsub.s32 %v270, %v320
      %v322 = vrot.slane %v214, %v321
      %v323 = vsel %vm275, %v322, %v318
      %v324 = vlaneseq
      %v325 = vshrl.u32 %v324, 7
      %v326 = vsub.s32 %v277, %v325
      %v327 = vrot.slane %v215, %v326
      %v328 = vsel %vm282, %v327, %v323
      %v329 = vlaneseq
      %v330 = vshrl.u32 %v329, 7
      %v331 = vsub.s32 %v284, %v330
      %v332 = vrot.slane %v216, %v331
      %v333 = vsel %vm289, %v332, %v328
      %v334 = vlaneseq
      %v335 = vshrl.u32 %v334, 7
      %v336 = vsub.s32 %v291, %v335
      %v337 = vrot.slane %v217, %v336
      %v338 = vsel %vm296, %v337, %v333
      %v339 = vlaneseq
      %v340 = vshrl.u32 %v339, 7
      %v341 = vsub.s32 %v298, %v340
      %v342 = vrot.slane %v218, %v341
      %v343 = vsel %vm303, %v342, %v338
      %vm344 = vcmask 1041409
      %v345 = vsel %vm344, %v343, %v304
      %vm346 = vcmask 523264
      %v347 = vsel %vm346, %v345, 0
      %349 = vmatprep.subr.mxu0 0.0
      %350 = vmatpush1.msra.mxu0 0.0
      %351 = vmatprep.subr.mxu0 0.0
      %352 = vmatpush1.msra.mxu0 0.0
      %353 = vmatprep.subr.mxu0 0.0
      %354 = vmatpush1.msra.mxu0 0.0
      %355 = vmatprep.subr.mxu0 0.0
      %356 = vmatpush1.msra.mxu0 0.0
      %357 = vmatprep.subr.mxu0 0.0
      %358 = vmatpush1.msra.mxu0 0.0
      %359 = vmatprep.subr.mxu0 0.0
      %360 = vmatpush1.msra.mxu0 0.0
      %361 = vmatprep.subr.mxu0 0.0
      %362 = vmatpush1.msra.mxu0 0.0
      %363 = vmatprep.subr.mxu0 0.0
      %364 = vmatpush1.msra.mxu0 0.0
      %365 = vmatprep.subr.mxu0 0.0
      %366 = vmatpush1.msra.mxu0 %v226
      %367 = vmatprep.subr.mxu0 0.0
      %368 = vmatpush1.msra.mxu0 %v225
      %369 = vmatprep.subr.mxu0 0.0
      %370 = vmatpush1.msra.mxu0 %v224
      %371 = vmatprep.subr.mxu0 0.0
      %372 = vmatpush1.msra.mxu0 %v223
      %373 = vmatprep.subr.mxu0 0.0
      %374 = vmatpush1.msra.mxu0 %v222
      %375 = vmatprep.subr.mxu0 0.0
      %376 = vmatpush1.msra.mxu0 %v221
      %377 = vmatprep.subr.mxu0 0.0
      %378 = vmatpush1.msra.mxu0 %v220
      %379 = vmatprep.subr.mxu0 0.0
      %380 = vmatpush1.msra.mxu0 %v219
      %381 = vmatprep.subr.mxu0 0.0
      %382 = vmatpush2.msra.mxu0 0.0
      %383 = vmatprep.subr.mxu0 0.0
      %384 = vmatpush2.msra.mxu0 0.0
      %385 = vmatprep.subr.mxu0 0.0
      %386 = vmatpush2.msra.mxu0 0.0
      %387 = vmatprep.subr.mxu0 0.0
      %388 = vmatpush2.msra.mxu0 0.0
      %389 = vmatprep.subr.mxu0 0.0
      %390 = vmatpush2.msra.mxu0 0.0
      %391 = vmatprep.subr.mxu0 0.0
      %392 = vmatpush2.msra.mxu0 0.0
      %393 = vmatprep.subr.mxu0 0.0
      %394 = vmatpush2.msra.mxu0 0.0
      %395 = vmatprep.subr.mxu0 0.0
      %396 = vmatpush2.msra.mxu0 0.0
      %397 = vmatprep.subr.mxu0 0.0
      %398 = vmatpush2.msra.mxu0 0.0
      %399 = vmatprep.subr.mxu0 0.0
      %400 = vmatpush2.msra.mxu0 0.0
      %401 = vmatprep.subr.mxu0 0.0
      %402 = vmatpush2.msra.mxu0 0.0
      %403 = vmatprep.subr.mxu0 0.0
      %404 = vmatpush2.msra.mxu0 0.0
      %405 = vmatprep.subr.mxu0 0.0
      %406 = vmatpush2.msra.mxu0 0.0
      %407 = vmatprep.subr.mxu0 0.0
      %408 = vmatpush2.msra.mxu0 0.0
      %409 = vmatprep.subr.mxu0 0.0
      %410 = vmatpush2.msra.mxu0 0.0
      %411 = vmatprep.subr.mxu0 0.0
      %412 = vmatpush2.msra.mxu0 0.0
      %413 = vmatprep.mubr.f32.mxu0 0.0
      %414 = vmatmul.mubr.f32.gmra.mxu0 %v347
      %v415 = vpop.f32.mrf.mxu0
      %v416 = vadd.f32 %v232, %v415
      %v417 = vpop.f32.mrf.mxu0
      %418 = vdwg.mxu0
      %v419 = vmax.f32 %v416, 0.0
      %v420 = vld [vmem:[%s3] sm:$0xf]
      %v421 = vld [vmem:[%s4] sm:$0x1]
      %v423 = vlaneseq
      %v424 = vshrl.u32 %v423, 7
      %v425 = vsub.s32 0, %v424
      %v426 = vrot.slane %v421, %v425
      %vm428 = vcmask 31744
      %v430 = vsel %vm428, %v419, 0
      %vm432 = vcmask 1043456
      %v434 = vsel %vm432, %v420, 0
      %436 = vmatprep.subr.mxu0 0.0
      %437 = vmatpush1.msra.mxu0 0.0
      %438 = vmatprep.subr.mxu0 0.0
      %439 = vmatpush1.msra.mxu0 0.0
      %440 = vmatprep.subr.mxu0 0.0
      %441 = vmatpush1.msra.mxu0 0.0
      %442 = vmatprep.subr.mxu0 0.0
      %443 = vmatpush1.msra.mxu0 0.0
      %444 = vmatprep.subr.mxu0 0.0
      %445 = vmatpush1.msra.mxu0 0.0
      %446 = vmatprep.subr.mxu0 0.0
      %447 = vmatpush1.msra.mxu0 0.0
      %448 = vmatprep.subr.mxu0 0.0
      %449 = vmatpush1.msra.mxu0 0.0
      %450 = vmatprep.subr.mxu0 0.0
      %451 = vmatpush1.msra.mxu0 0.0
      %452 = vmatprep.subr.mxu0 0.0
      %453 = vmatpush1.msra.mxu0 0.0
      %454 = vmatprep.subr.mxu0 0.0
      %455 = vmatpush1.msra.mxu0 0.0
      %456 = vmatprep.subr.mxu0 0.0
      %457 = vmatpush1.msra.mxu0 0.0
      %458 = vmatprep.subr.mxu0 0.0
      %459 = vmatpush1.msra.mxu0 0.0
      %460 = vmatprep.subr.mxu0 0.0
      %461 = vmatpush1.msra.mxu0 0.0
      %462 = vmatprep.subr.mxu0 0.0
      %463 = vmatpush1.msra.mxu0 0.0
      %464 = vmatprep.subr.mxu0 0.0
      %465 = vmatpush1.msra.mxu0 0.0
      %466 = vmatprep.subr.mxu0 0.0
      %467 = vmatpush1.msra.mxu0 %v434
      %468 = vmatprep.subr.mxu0 0.0
      %469 = vmatpush2.msra.mxu0 0.0
      %470 = vmatprep.subr.mxu0 0.0
      %471 = vmatpush2.msra.mxu0 0.0
      %472 = vmatprep.subr.mxu0 0.0
      %473 = vmatpush2.msra.mxu0 0.0
      %474 = vmatprep.subr.mxu0 0.0
      %475 = vmatpush2.msra.mxu0 0.0
      %476 = vmatprep.subr.mxu0 0.0
      %477 = vmatpush2.msra.mxu0 0.0
      %478 = vmatprep.subr.mxu0 0.0
      %479 = vmatpush2.msra.mxu0 0.0
      %480 = vmatprep.subr.mxu0 0.0
      %481 = vmatpush2.msra.mxu0 0.0
      %482 = vmatprep.subr.mxu0 0.0
      %483 = vmatpush2.msra.mxu0 0.0
      %484 = vmatprep.subr.mxu0 0.0
      %485 = vmatpush2.msra.mxu0 0.0
      %486 = vmatprep.subr.mxu0 0.0
      %487 = vmatpush2.msra.mxu0 0.0
      %488 = vmatprep.subr.mxu0 0.0
      %489 = vmatpush2.msra.mxu0 0.0
      %490 = vmatprep.subr.mxu0 0.0
      %491 = vmatpush2.msra.mxu0 0.0
      %492 = vmatprep.subr.mxu0 0.0
      %493 = vmatpush2.msra.mxu0 0.0
      %494 = vmatprep.subr.mxu0 0.0
      %495 = vmatpush2.msra.mxu0 0.0
      %496 = vmatprep.subr.mxu0 0.0
      %497 = vmatpush2.msra.mxu0 0.0
      %498 = vmatprep.subr.mxu0 0.0
      %499 = vmatpush2.msra.mxu0 0.0
      %500 = vmatprep.mubr.f32.mxu0 0.0
      %501 = vmatmul.mubr.f32.gmra.mxu0 %v430
      %v502 = vpop.f32.mrf.mxu0
      %v503 = vadd.f32 %v426, %v502
      %v504 = vpop.f32.mrf.mxu0
      %505 = vdwg.mxu0
      %v506 = vxor.u32 %v503, 2147483648
      %v507 = vmul.f32 %v506, 1.442695
      %v508 = vpow.pop %v507
      %v509 = vadd.f32 %v508, 1.0
      %v510 = vrcp.pop %v509
      %v511 = vmul.f32 1.0, %v510
      %vm512 = vcmask 517120
      %513 = vst.msk [vmem:[#allocation6] sm:$0x3] %vm512, %v511
    $region33: #{tpu_custom_call.1} parent=1 // pred_fallthru
      _
    // Predicated region
    $region34: #{tpu_custom_call.1} parent=1 // pred_check
      _
    $region35: #{tpu_custom_call.1} parent=1 // pred_check_branch
      %515 = sbr.rel (0) target = $region37
    $region36: #{tpu_custom_call.1} parent=1 // pred_region
      %s517 = ssub.s32 32, 32
      %518 = vsyncadd [#allocation5], %s517
      %s520 = sshll.u32 [#allocation6], 4
      %s521 = int_to_ptr.vmem [resolvable:$true] %s520
      %523 = dma.vmem_to_hbm [thread:$0]  %s521, 32, %s5, [#allocation5]
    $region37: #{tpu_custom_call.1} parent=1 // pred_fallthru
      _
    // Predicated region
    $region38: #{tpu_custom_call.1} parent=1 // pred_check
      _
    $region39: #{tpu_custom_call.1} parent=1 // pred_check_branch
      %525 = sbr.rel (0) target = $region41
    $region40: #{tpu_custom_call.1} parent=1 // pred_region
      %526 = dma.done [#allocation5], 32
    $region41: #{tpu_custom_call.1} parent=1 // pred_fallthru
      _
    %527 = vsyncpa [#allocation4], 1
    %528 = vsyncpa [#allocation5], 1

</llo_original>
